<compile_context>
chip_gen: v7x
topology: tpu7x:2x2x1
jax: 0.10.0
libtpu: 0.0.40
codegen_flags: <defaults>
</compile_context>

<pallas_src>
import functools

import jax
import jax.numpy as jnp
from jax.experimental import pallas as pl
from jax.experimental.pallas import tpu as pltpu

EPSILON = 1e-9


def _accumulate(loss, m, sum_ref, cnt_ref):
    # loss, m: (tile_rows, N) f32.  Reduce the row-tile into the resident (8, N)
    # accumulator with layout-preserving reshape + leading-axis sum (pure VPU adds).
    rows, n = loss.shape
    g = rows // 8
    sum_ref[...] += jnp.sum((loss * m).reshape(g, 8, n), axis=0)
    cnt_ref[...] += jnp.sum(m.reshape(g, 8, n), axis=0)


def _kd_soft_kernel(a_ref, b_ref, m_ref, sum_ref, cnt_ref, *, inv_tau):
    @pl.when(pl.program_id(1) == 0)
    def _():
        sum_ref[...] = jnp.zeros_like(sum_ref)
        cnt_ref[...] = jnp.zeros_like(cnt_ref)

    ss = a_ref[...].astype(jnp.float32) * inv_tau
    st = b_ref[...].astype(jnp.float32) * inv_tau
    ls = jax.nn.sigmoid(ss)
    lt = jax.nn.sigmoid(st)
    # log((1-lt+eps)/(1-ls+eps)) == log(1-lt+eps) - log(1-ls+eps)  (no EUP divide)
    loss = lt * (st - ss) + (jnp.log(1.0 - lt + EPSILON) - jnp.log(1.0 - ls + EPSILON))
    m = m_ref[...].astype(jnp.float32)
    _accumulate(loss, m, sum_ref, cnt_ref)


def _kd_hard_kernel(a_ref, b_ref, m_ref, sum_ref, cnt_ref):
    @pl.when(pl.program_id(1) == 0)
    def _():
        sum_ref[...] = jnp.zeros_like(sum_ref)
        cnt_ref[...] = jnp.zeros_like(cnt_ref)

    p = a_ref[...].astype(jnp.float32)
    t = jnp.round(b_ref[...].astype(jnp.float32))
    # torch's binary_cross_entropy clamps log terms at -100; p outside [0,1] would
    # be NaN exactly as in PyTorch (no guard).
    log_p = jnp.maximum(jnp.log(p), -100.0)
    log_1mp = jnp.maximum(jnp.log(1.0 - p), -100.0)
    bce = -(t * log_p + (1.0 - t) * log_1mp)
    m = m_ref[...].astype(jnp.float32)
    _accumulate(bce, m, sum_ref, cnt_ref)


def kd_loss(output_dict_s, output_dict_t, mask, *, mode="soft", tau=2.0):
    """Masked KD loss (== loss[mask].mean()); mask is boolean [B, N]."""
    if mode == "soft":
        a = output_dict_s["scores"]
        b = output_dict_t["scores"]
        kernel = functools.partial(_kd_soft_kernel, inv_tau=float(1.0 / tau))
        trans_per_elem = 4  # 2 sigmoid + 2 log
    else:
        a = output_dict_s["logits"]
        b = output_dict_t["logits"]
        kernel = _kd_hard_kernel
        trans_per_elem = 2  # 2 log

    B, N = a.shape
    itemsize = jnp.dtype(a.dtype).itemsize
    m8 = mask.astype(jnp.int8)  # 1 B/elem mask traffic; cast to f32 in-kernel

    # ---- tile selection: big row tiles, budgeted against VMEM ----------------
    half_rows = -(-B // 2)                       # rows per core (ceil)
    half_rounded = -(-half_rows // 32) * 32      # int8 sublane tile is 32 rows
    bytes_per_row = N * (2 * itemsize + 1)       # two score tiles + int8 mask
    vmem_tile_budget = 16 * 1024 * 1024          # live input tiles (x2 dbl-buffer)
    max_rows = max(32, (vmem_tile_budget // (2 * bytes_per_row)) // 32 * 32)
    tile_rows = int(min(1024, max_rows, half_rounded))

    T = -(-half_rows // tile_rows)               # row tiles per core
    Bp = 2 * T * tile_rows                       # padded row count
    if Bp != B:
        pad = Bp - B
        a = jnp.pad(a, ((0, pad), (0, 0)))       # zero rows are loss==0 and mask==0
        b = jnp.pad(b, ((0, pad), (0, 0)))
        m8 = jnp.pad(m8, ((0, pad), (0, 0)))

    def row_map(c, i):
        return (c * T + i, 0)

    in_spec = pl.BlockSpec((tile_rows, N), row_map)
    out_spec = pl.BlockSpec((8, N), lambda c, i: (c, 0))  # per-core resident accumulator

    cost = pl.CostEstimate(
        flops=int(10 * Bp * N),
        transcendentals=int(trans_per_elem * Bp * N),
        bytes_accessed=int(Bp * N * (2 * itemsize + 1) + 2 * 16 * N * 4),
    )

    sums, counts = pl.pallas_call(
        kernel,
        out_shape=(
            jax.ShapeDtypeStruct((16, N), jnp.float32),  # (2 cores) x (8, N) partial sums
            jax.ShapeDtypeStruct((16, N), jnp.float32),  # (2 cores) x (8, N) mask counts
        ),
        grid_spec=pltpu.PrefetchScalarGridSpec(
            num_scalar_prefetch=0,
            grid=(2, T),
            in_specs=[in_spec, in_spec, in_spec],
            out_specs=(out_spec, out_spec),
        ),
        compiler_params=pltpu.CompilerParams(
            dimension_semantics=("parallel", "arbitrary"),
            vmem_limit_bytes=32 * 1024 * 1024,
        ),
        cost_estimate=cost,
    )(a, b, m8)

    loss = jnp.sum(sums) / jnp.sum(counts)  # masked mean (loss[mask].mean())
    if mode == "soft":
        loss = loss * (tau ** 2)
    return loss


def _kd_loss_ref(output_dict_s, output_dict_t, mask, *, mode="soft", tau=2.0):
    """Pure-JAX reference mirroring the PyTorch forward."""
    mask_f = mask.astype(jnp.float32)
    denom = jnp.sum(mask_f)
    if mode == "soft":
        ss = output_dict_s["scores"].astype(jnp.float32) / tau
        st = output_dict_t["scores"].astype(jnp.float32) / tau
        ls = jax.nn.sigmoid(ss)
        lt = jax.nn.sigmoid(st)
        loss = lt * (st - ss) + jnp.log((1.0 - lt + EPSILON) / (1.0 - ls + EPSILON))
        return jnp.sum(loss * mask_f) / denom * (tau ** 2)
    else:
        p = output_dict_s["logits"].astype(jnp.float32)
        t = jnp.round(output_dict_t["logits"].astype(jnp.float32))
        bce = -(t * jnp.maximum(jnp.log(p), -100.0)
                + (1.0 - t) * jnp.maximum(jnp.log(1.0 - p), -100.0))
        return jnp.sum(bce * mask_f) / denom


if __name__ == "__main__":
    key = jax.random.PRNGKey(0)
    k1, k2, k3 = jax.random.split(key, 3)

    B, N = 128, 256  # small: 128 predictions x 256 queries/classes
    tau = 2.0

    scores_s = jax.random.normal(k1, (B, N), dtype=jnp.float32)
    scores_t = jax.random.normal(k2, (B, N), dtype=jnp.float32)
    mask = jax.random.uniform(k3, (B, N)) > 0.5
    mask = mask.at[0, 0].set(True)  # guarantee non-empty mask

    out_s = {"scores": scores_s, "logits": jax.nn.sigmoid(scores_s)}
    out_t = {"scores": scores_t, "logits": jax.nn.sigmoid(scores_t)}

    # soft mode
    loss_soft = kd_loss(out_s, out_t, mask, mode="soft", tau=tau)
    jax.block_until_ready(loss_soft)
    ref_soft = _kd_loss_ref(out_s, out_t, mask, mode="soft", tau=tau)
    assert jnp.allclose(loss_soft, ref_soft, rtol=1e-4, atol=1e-5), (loss_soft, ref_soft)

    # hard mode
    loss_hard = kd_loss(out_s, out_t, mask, mode="hard", tau=tau)
    jax.block_until_ready(loss_hard)
    ref_hard = _kd_loss_ref(out_s, out_t, mask, mode="hard", tau=tau)
    assert jnp.allclose(loss_hard, ref_hard, rtol=1e-4, atol=1e-5), (loss_hard, ref_hard)

    # ragged B (exercises the row-padding path; padded rows carry mask=0 / loss=0)
    B2 = 20
    out_s2 = {"scores": scores_s[:B2], "logits": jax.nn.sigmoid(scores_s[:B2])}
    out_t2 = {"scores": scores_t[:B2], "logits": jax.nn.sigmoid(scores_t[:B2])}
    mask2 = mask[:B2].at[0, 0].set(True)
    loss_pad = kd_loss(out_s2, out_t2, mask2, mode="soft", tau=tau)
    jax.block_until_ready(loss_pad)
    ref_pad = _kd_loss_ref(out_s2, out_t2, mask2, mode="soft", tau=tau)
    assert jnp.allclose(loss_pad, ref_pad, rtol=1e-4, atol=1e-5), (loss_pad, ref_pad)

    # bf16 scores (halved HBM traffic; kernel upcasts to f32 internally)
    ss_bf = scores_s.astype(jnp.bfloat16)
    st_bf = scores_t.astype(jnp.bfloat16)
    out_s3 = {"scores": ss_bf, "logits": jax.nn.sigmoid(ss_bf)}
    out_t3 = {"scores": st_bf, "logits": jax.nn.sigmoid(st_bf)}
    loss_bf = kd_loss(out_s3, out_t3, mask, mode="soft", tau=tau)
    jax.block_until_ready(loss_bf)
    ref_bf = _kd_loss_ref(out_s3, out_t3, mask, mode="soft", tau=tau)
    assert jnp.allclose(loss_bf, ref_bf, rtol=1e-3, atol=1e-4), (loss_bf, ref_bf)

    print("KERNEL_OK")
</pallas_src>

<mosaic_0001>
module attributes {stable_mosaic.version = 11 : i64} {
  func.func @_kd_soft_kernel(%arg0: i32, %arg1: i32, %arg2: memref<64x256xf32, #tpu.memory_space<vmem>>, %arg3: memref<64x256xf32, #tpu.memory_space<vmem>>, %arg4: memref<64x256xi8, #tpu.memory_space<vmem>>, %arg5: memref<8x256xf32, #tpu.memory_space<vmem>>, %arg6: memref<8x256xf32, #tpu.memory_space<vmem>>) attributes {dimension_semantics = [#tpu.dimension_semantics<parallel>, #tpu.dimension_semantics<arbitrary>], iteration_bounds = array<i64: 2, 1>, scalar_prefetch = 0 : i64, scratch_operands = 0 : i64, tpu.core_type = #tpu.core_type<tc>, window_params = [{transform_indices = @transform_0, window_bounds = array<i64: 64, 256>}, {transform_indices = @transform_1, window_bounds = array<i64: 64, 256>}, {transform_indices = @transform_2, window_bounds = array<i64: 64, 256>}, {transform_indices = @transform_3, window_bounds = array<i64: 8, 256>}, {transform_indices = @transform_4, window_bounds = array<i64: 8, 256>}]} {
    %c0_i32 = arith.constant 0 : i32
    %0 = arith.cmpi eq, %arg1, %c0_i32 : i32
    %1 = arith.extui %0 : i1 to i32
    %c0_i32_0 = arith.constant 0 : i32
    %2 = arith.cmpi ne, %1, %c0_i32_0 : i32
    scf.if %2 {
      %cst_23 = arith.constant 0.000000e+00 : f32
      %46 = vector.broadcast %cst_23 : f32 to vector<8x256xf32>
      %c0_24 = arith.constant 0 : index
      %c0_25 = arith.constant 0 : index
      %47 = vector.load %arg5[%c0_24, %c0_25] : memref<8x256xf32, #tpu.memory_space<vmem>>, vector<8x256xf32>
      tpu.vector_store %arg5[%c0_24, %c0_25], %46 {strides = array<i32>} : memref<8x256xf32, #tpu.memory_space<vmem>>, vector<8x256xf32>,
      %cst_26 = arith.constant 0.000000e+00 : f32
      %48 = vector.broadcast %cst_26 : f32 to vector<8x256xf32>
      %c0_27 = arith.constant 0 : index
      %c0_28 = arith.constant 0 : index
      %49 = vector.load %arg6[%c0_27, %c0_28] : memref<8x256xf32, #tpu.memory_space<vmem>>, vector<8x256xf32>
      tpu.vector_store %arg6[%c0_27, %c0_28], %48 {strides = array<i32>} : memref<8x256xf32, #tpu.memory_space<vmem>>, vector<8x256xf32>,
    } else {
    }
    %c0 = arith.constant 0 : index
    %c0_1 = arith.constant 0 : index
    %3 = vector.load %arg2[%c0, %c0_1] : memref<64x256xf32, #tpu.memory_space<vmem>>, vector<64x256xf32>
    %cst = arith.constant 5.000000e-01 : f32
    %4 = vector.broadcast %cst : f32 to vector<64x256xf32>
    %5 = arith.mulf %3, %4 : vector<64x256xf32>
    %c0_2 = arith.constant 0 : index
    %c0_3 = arith.constant 0 : index
    %6 = vector.load %arg3[%c0_2, %c0_3] : memref<64x256xf32, #tpu.memory_space<vmem>>, vector<64x256xf32>
    %cst_4 = arith.constant 5.000000e-01 : f32
    %7 = vector.broadcast %cst_4 : f32 to vector<64x256xf32>
    %8 = arith.mulf %6, %7 : vector<64x256xf32>
    %9 = arith.negf %5 : vector<64x256xf32>
    %10 = math.exp %9 : vector<64x256xf32>
    %cst_5 = arith.constant 1.000000e+00 : f32
    %11 = vector.broadcast %cst_5 : f32 to vector<64x256xf32>
    %12 = arith.addf %11, %10 : vector<64x256xf32>
    %13 = arith.divf %11, %12 : vector<64x256xf32>
    %14 = arith.negf %8 : vector<64x256xf32>
    %15 = math.exp %14 : vector<64x256xf32>
    %cst_6 = arith.constant 1.000000e+00 : f32
    %16 = vector.broadcast %cst_6 : f32 to vector<64x256xf32>
    %17 = arith.addf %16, %15 : vector<64x256xf32>
    %18 = arith.divf %16, %17 : vector<64x256xf32>
    %19 = arith.subf %8, %5 : vector<64x256xf32>
    %20 = arith.mulf %18, %19 : vector<64x256xf32>
    %cst_7 = arith.constant 1.000000e+00 : f32
    %21 = vector.broadcast %cst_7 : f32 to vector<64x256xf32>
    %22 = arith.subf %21, %18 : vector<64x256xf32>
    %cst_8 = arith.constant 9.99999971E-10 : f32
    %23 = vector.broadcast %cst_8 : f32 to vector<64x256xf32>
    %24 = arith.addf %22, %23 : vector<64x256xf32>
    %25 = math.log %24 : vector<64x256xf32>
    %cst_9 = arith.constant 1.000000e+00 : f32
    %26 = vector.broadcast %cst_9 : f32 to vector<64x256xf32>
    %27 = arith.subf %26, %13 : vector<64x256xf32>
    %cst_10 = arith.constant 9.99999971E-10 : f32
    %28 = vector.broadcast %cst_10 : f32 to vector<64x256xf32>
    %29 = arith.addf %27, %28 : vector<64x256xf32>
    %30 = math.log %29 : vector<64x256xf32>
    %31 = arith.subf %25, %30 : vector<64x256xf32>
    %32 = arith.addf %20, %31 : vector<64x256xf32>
    %c0_11 = arith.constant 0 : index
    %c0_12 = arith.constant 0 : index
    %33 = vector.load %arg4[%c0_11, %c0_12] : memref<64x256xi8, #tpu.memory_space<vmem>>, vector<64x256xi8>
    %34 = arith.sitofp %33 : vector<64x256xi8> to vector<64x256xf32>
    %c0_13 = arith.constant 0 : index
    %c0_14 = arith.constant 0 : index
    %35 = vector.load %arg5[%c0_13, %c0_14] : memref<8x256xf32, #tpu.memory_space<vmem>>, vector<8x256xf32>
    %36 = arith.mulf %32, %34 : vector<64x256xf32>
    %37 = vector.shape_cast %36 : vector<64x256xf32> to vector<8x8x256xf32>
    %cst_15 = arith.constant dense<0.000000e+00> : vector<8x256xf32>
    %38 = vector.multi_reduction <add>, %37, %cst_15 [0] : vector<8x8x256xf32> to vector<8x256xf32>
    %39 = arith.addf %35, %38 : vector<8x256xf32>
    %c0_16 = arith.constant 0 : index
    %c0_17 = arith.constant 0 : index
    %40 = vector.load %arg5[%c0_16, %c0_17] : memref<8x256xf32, #tpu.memory_space<vmem>>, vector<8x256xf32>
    tpu.vector_store %arg5[%c0_16, %c0_17], %39 {strides = array<i32>} : memref<8x256xf32, #tpu.memory_space<vmem>>, vector<8x256xf32>,
    %c0_18 = arith.constant 0 : index
    %c0_19 = arith.constant 0 : index
    %41 = vector.load %arg6[%c0_18, %c0_19] : memref<8x256xf32, #tpu.memory_space<vmem>>, vector<8x256xf32>
    %42 = vector.shape_cast %34 : vector<64x256xf32> to vector<8x8x256xf32>
    %cst_20 = arith.constant dense<0.000000e+00> : vector<8x256xf32>
    %43 = vector.multi_reduction <add>, %42, %cst_20 [0] : vector<8x8x256xf32> to vector<8x256xf32>
    %44 = arith.addf %41, %43 : vector<8x256xf32>
    %c0_21 = arith.constant 0 : index
    %c0_22 = arith.constant 0 : index
    %45 = vector.load %arg6[%c0_21, %c0_22] : memref<8x256xf32, #tpu.memory_space<vmem>>, vector<8x256xf32>
    tpu.vector_store %arg6[%c0_21, %c0_22], %44 {strides = array<i32>} : memref<8x256xf32, #tpu.memory_space<vmem>>, vector<8x256xf32>,
    return
  }
  func.func @transform_0(%arg0: i32, %arg1: i32) -> (i32, i32) {
    %c1_i32 = arith.constant 1 : i32
    %0 = arith.muli %arg0, %c1_i32 : i32
    %1 = arith.addi %0, %arg1 : i32
    %c0_i32 = arith.constant 0 : i32
    %c0_i32_0 = arith.constant 0 : i32
    return %1, %c0_i32 : i32, i32
  }
  func.func @transform_1(%arg0: i32, %arg1: i32) -> (i32, i32) {
    %c1_i32 = arith.constant 1 : i32
    %0 = arith.muli %arg0, %c1_i32 : i32
    %1 = arith.addi %0, %arg1 : i32
    %c0_i32 = arith.constant 0 : i32
    %c0_i32_0 = arith.constant 0 : i32
    return %1, %c0_i32 : i32, i32
  }
  func.func @transform_2(%arg0: i32, %arg1: i32) -> (i32, i32) {
    %c1_i32 = arith.constant 1 : i32
    %0 = arith.muli %arg0, %c1_i32 : i32
    %1 = arith.addi %0, %arg1 : i32
    %c0_i32 = arith.constant 0 : i32
    %c0_i32_0 = arith.constant 0 : i32
    return %1, %c0_i32 : i32, i32
  }
  func.func @transform_3(%arg0: i32, %arg1: i32) -> (i32, i32) {
    %c0_i32 = arith.constant 0 : i32
    %c0_i32_0 = arith.constant 0 : i32
    return %arg0, %c0_i32 : i32, i32
  }
  func.func @transform_4(%arg0: i32, %arg1: i32) -> (i32, i32) {
    %c0_i32 = arith.constant 0 : i32
    %c0_i32_0 = arith.constant 0 : i32
    return %arg0, %c0_i32 : i32, i32
  }
}

</mosaic_0001>

<llo_original>
// kernel: tpu_custom_call.1
$region0: #{tpu_custom_call.1}
  #allocation0 [shape = 'u32[]', space=smem, size = 0x4, offset = 0x4, fixed_abs, tag = 'smem constant byte address 0x4 - core index']
  #allocation1 [shape = 'u32[144,128]{1,0:T(1,128)}', space=vmem, size = 0x12000, scoped, tag = 'internal scratch']
  %s0 = inlined_call_operand.hbm [shape: f32[128,256], index: 0, kind: input, shape index: {}]
  %s1 = inlined_call_operand.hbm [shape: f32[128,256], index: 1, kind: input, shape index: {}]
  %s2 = inlined_call_operand.hbm [shape: s8[128,256], index: 2, kind: input, shape index: {}]
  %s3 = inlined_call_operand.hbm [shape: f32[16,256], index: 3, kind: output, shape index: {0}]
  %s4 = inlined_call_operand.hbm [shape: f32[16,256], index: 4, kind: output, shape index: {1}]
  %5 = xla_tuple %s3, %s4
  %s6 = sld [smem:[#allocation0]]
  $region69: #{tpu_custom_call.1} parent=0
    _
  %s8 = ssub.s32 1, %s6
  %s9 = scalar_select 0, %s8, %s6
  $region1: #{tpu_custom_call.1} parent=0
    #allocation2 [shape = 'u8[131072]{0}', space=vmem, size = 0x20000, scoped, tag = 'input window, operand 0']
    #allocation3 [shape = 's32[2]{0}', space=sflag, size = 0x8, scoped, tag = 'scoped memory for tpu_custom_call.1']
    #allocation4 [shape = 's32[2]{0}', space=sflag, size = 0x8, scoped, tag = 'scoped memory for tpu_custom_call.1']
    #allocation5 [shape = 'u8[131072]{0}', space=vmem, size = 0x20000, scoped, tag = 'input window, operand 1']
    #allocation6 [shape = 's32[2]{0}', space=sflag, size = 0x8, scoped, tag = 'scoped memory for tpu_custom_call.1']
    #allocation7 [shape = 'u8[32768]{0}', space=vmem, size = 0x8000, scoped, tag = 'input window, operand 2']
    #allocation8 [shape = 'u8[16384]{0}', space=vmem, size = 0x4000, scoped, tag = 'output window, operand 0']
    #allocation9 [shape = 'u8[16384]{0}', space=vmem, size = 0x4000, scoped, tag = 'output window, operand 1']
    #allocation10 [shape = 's32[2]{0}', space=sflag, size = 0x8, scoped, tag = 'scoped memory for tpu_custom_call.1']
    %10 = vsyncpa [#allocation3], 0
    %s11 = scalar_lea.sflag [#allocation3], 1
    %12 = vsyncpa %s11, 0
    %13 = vsyncpa [#allocation6], 0
    %s14 = scalar_lea.sflag [#allocation6], 1
    %15 = vsyncpa %s14, 0
    %16 = vsyncpa [#allocation4], 0
    %s17 = scalar_lea.sflag [#allocation4], 1
    %18 = vsyncpa %s17, 0
    %19 = vsyncpa [#allocation10], 0
    %s20 = scalar_lea.sflag [#allocation10], 1
    %21 = vsyncpa %s20, 0
    loop: start=0, step=1, limit=4
    $region2: #{tpu_custom_call.1} parent=1 // loop_pre_header
      _
    $region3: #{tpu_custom_call.1} parent=1 // loop_header
      %s23 = sphi 0, %s27
      %p24 = scmp.ge.s32.totalorder %s23, 4
      %s30 = sphi 0, %s42
      %s31 = sphi 0, %s38
      %s32 = sphi 0, %s30
      %s33 = sphi 0, %s31
      %s34 = sphi 0, %s32
      %s35 = sphi 0, %s33
      %s47 = sphi 0, %s49
      %s50 = sphi 0, %s47
      %s51 = sphi 0, %s50
      %s67 = sphi 0, %s51
      %s75 = sphi 0, %s77
      %s78 = sphi 0, %s75
      %s79 = sphi 0, %s78
      %s95 = sphi 0, %s79
      %s103 = sphi 0, %s105
      %s106 = sphi 0, %s103
      %s107 = sphi 0, %s106
      %s123 = sphi 0, %s107
      %s129 = sphi 0, %s131
      %s132 = sphi 0, %s129
      %s133 = sphi 0, %s132
      %s149 = sphi 0, %s133
      %s155 = sphi 0, %s157
      %s158 = sphi 0, %s155
      %s159 = sphi 0, %s158
      %s175 = sphi 0, %s159
    $region4: #{tpu_custom_call.1} parent=1 // loop_header_branch
      %26 = sbr.rel (%p24) target = $region8
    $region5: #{tpu_custom_call.1} parent=1 // loop_body
      %s28 = ssub.s32 %s23, 1
      %s29 = ssub.s32 %s23, 2
      %s36 = sadd.s32 1, %s31
      %p37 = scmp.ge.s32.totalorder %s36, 1
      %s38 = scalar_select %p37, 0, %s36
      %s39 = sadd.s32 1, %s30
      %s40 = scalar_select %p37, %s39, %s30
      %p41 = scmp.ge.s32.totalorder %s40, 2
      %s42 = scalar_select %p41, 0, %s40
      %s43 = sadd.s32 %s30, %s31
      %s44 = sadd.s32 %s42, %s38
      %s45 = ssub.s32 %s43, %s44
      %p46 = scmp.eq.s32.totalorder %s45, 0
      %s48 = sadd.s32 %s47, 1
      %s49 = scalar_select %p46, %s47, %s48
      %p52 = pneg %p46
      %p53 = scmp.eq.s32.totalorder %s23, 1
      %p54 = por %p52, %p53
      %p55 = scmp.ne.s32.totalorder %s47, %s50
      %p56 = scmp.eq.s32.totalorder %s23, 0
      %p57 = por %p55, %p56
      %p58 = scmp.ne.s32.totalorder %s47, %s50
      %p59 = scmp.eq.s32.totalorder %s28, 1
      %p60 = por %p58, %p59
      %p61 = scmp.ne.s32.totalorder %s50, %s51
      %p62 = scmp.eq.s32.totalorder %s28, 0
      %p63 = por %p61, %p62
      %p64 = scmp.ne.s32.totalorder %s50, %s51
      %p65 = scmp.eq.s32.totalorder %s29, 1
      %p66 = por %p64, %p65
      %p68 = scmp.ne.s32.totalorder %s51, %s67
      %p69 = scmp.eq.s32.totalorder %s29, 0
      %p70 = por %p68, %p69
      %s71 = sadd.s32 %s30, %s31
      %s72 = sadd.s32 %s42, %s38
      %s73 = ssub.s32 %s71, %s72
      %p74 = scmp.eq.s32.totalorder %s73, 0
      %s76 = sadd.s32 %s75, 1
      %s77 = scalar_select %p74, %s75, %s76
      %p80 = pneg %p74
      %p81 = scmp.eq.s32.totalorder %s23, 1
      %p82 = por %p80, %p81
      %p83 = scmp.ne.s32.totalorder %s75, %s78
      %p84 = scmp.eq.s32.totalorder %s23, 0
      %p85 = por %p83, %p84
      %p86 = scmp.ne.s32.totalorder %s75, %s78
      %p87 = scmp.eq.s32.totalorder %s28, 1
      %p88 = por %p86, %p87
      %p89 = scmp.ne.s32.totalorder %s78, %s79
      %p90 = scmp.eq.s32.totalorder %s28, 0
      %p91 = por %p89, %p90
      %p92 = scmp.ne.s32.totalorder %s78, %s79
      %p93 = scmp.eq.s32.totalorder %s29, 1
      %p94 = por %p92, %p93
      %p96 = scmp.ne.s32.totalorder %s79, %s95
      %p97 = scmp.eq.s32.totalorder %s29, 0
      %p98 = por %p96, %p97
      %s99 = sadd.s32 %s30, %s31
      %s100 = sadd.s32 %s42, %s38
      %s101 = ssub.s32 %s99, %s100
      %p102 = scmp.eq.s32.totalorder %s101, 0
      %s104 = sadd.s32 %s103, 1
      %s105 = scalar_select %p102, %s103, %s104
      %p108 = pneg %p102
      %p109 = scmp.eq.s32.totalorder %s23, 1
      %p110 = por %p108, %p109
      %p111 = scmp.ne.s32.totalorder %s103, %s106
      %p112 = scmp.eq.s32.totalorder %s23, 0
      %p113 = por %p111, %p112
      %p114 = scmp.ne.s32.totalorder %s103, %s106
      %p115 = scmp.eq.s32.totalorder %s28, 1
      %p116 = por %p114, %p115
      %p117 = scmp.ne.s32.totalorder %s106, %s107
      %p118 = scmp.eq.s32.totalorder %s28, 0
      %p119 = por %p117, %p118
      %p120 = scmp.ne.s32.totalorder %s106, %s107
      %p121 = scmp.eq.s32.totalorder %s29, 1
      %p122 = por %p120, %p121
      %p124 = scmp.ne.s32.totalorder %s107, %s123
      %p125 = scmp.eq.s32.totalorder %s29, 0
      %p126 = por %p124, %p125
      %s127 = ssub.s32 %s30, %s42
      %p128 = scmp.eq.s32.totalorder %s127, 0
      %s130 = sadd.s32 %s129, 1
      %s131 = scalar_select %p128, %s129, %s130
      %p134 = pneg %p128
      %p135 = scmp.eq.s32.totalorder %s23, 1
      %p136 = por %p134, %p135
      %p137 = scmp.ne.s32.totalorder %s129, %s132
      %p138 = scmp.eq.s32.totalorder %s23, 0
      %p139 = por %p137, %p138
      %p140 = scmp.ne.s32.totalorder %s129, %s132
      %p141 = scmp.eq.s32.totalorder %s28, 1
      %p142 = por %p140, %p141
      %p143 = scmp.ne.s32.totalorder %s132, %s133
      %p144 = scmp.eq.s32.totalorder %s28, 0
      %p145 = por %p143, %p144
      %p146 = scmp.ne.s32.totalorder %s132, %s133
      %p147 = scmp.eq.s32.totalorder %s29, 1
      %p148 = por %p146, %p147
      %p150 = scmp.ne.s32.totalorder %s133, %s149
      %p151 = scmp.eq.s32.totalorder %s29, 0
      %p152 = por %p150, %p151
      %s153 = ssub.s32 %s30, %s42
      %p154 = scmp.eq.s32.totalorder %s153, 0
      %s156 = sadd.s32 %s155, 1
      %s157 = scalar_select %p154, %s155, %s156
      %p160 = pneg %p154
      %p161 = scmp.eq.s32.totalorder %s23, 1
      %p162 = por %p160, %p161
      %p163 = scmp.ne.s32.totalorder %s155, %s158
      %p164 = scmp.eq.s32.totalorder %s23, 0
      %p165 = por %p163, %p164
      %p166 = scmp.ne.s32.totalorder %s155, %s158
      %p167 = scmp.eq.s32.totalorder %s28, 1
      %p168 = por %p166, %p167
      %p169 = scmp.ne.s32.totalorder %s158, %s159
      %p170 = scmp.eq.s32.totalorder %s28, 0
      %p171 = por %p169, %p170
      %p172 = scmp.ne.s32.totalorder %s158, %s159
      %p173 = scmp.eq.s32.totalorder %s29, 1
      %p174 = por %p172, %p173
      %p176 = scmp.ne.s32.totalorder %s159, %s175
      %p177 = scmp.eq.s32.totalorder %s29, 0
      %p178 = por %p176, %p177
      %p179 = scmp.le.s32.totalorder 1, %s23
      %p180 = scmp.lt.s32.totalorder %s23, 3
      %p181 = pnand %p179, %p180
      %p182 = pneg %p181
      // Predicated region
      $region9: #{tpu_custom_call.1} parent=5 // pred_check
        _
      $region10: #{tpu_custom_call.1} parent=5 // pred_check_branch
        %184 = sbr.rel (%p181) target = $region12
      $region11: #{tpu_custom_call.1} parent=5 // pred_region
        %s185 = ssub.s32 %s23, 1
      $region12: #{tpu_custom_call.1} parent=5 // pred_fallthru
        _
      %p186 = scmp.lt.s32.totalorder %s23, 2
      // Predicated region
      $region13: #{tpu_custom_call.1} parent=5 // pred_check
        %p187 = pneg %p186
      $region14: #{tpu_custom_call.1} parent=5 // pred_check_branch
        %189 = sbr.rel (%p187) target = $region16
      $region15: #{tpu_custom_call.1} parent=5 // pred_region
        // Predicated region
        $region17: #{tpu_custom_call.1} parent=15 // pred_check
          %p190 = pneg %p57
        $region18: #{tpu_custom_call.1} parent=15 // pred_check_branch
          %192 = sbr.rel (%p190) target = $region20
        $region19: #{tpu_custom_call.1} parent=15 // pred_region
          %s193 = sand.u32 %s47, 1
          %s194 = scalar_lea.sflag [#allocation3], %s193
          %s195 = sand.u32 %s47, 1
          %s196 = smul.addr %s195, 128
          %s197 = scalar_lea.vmem [#allocation2], %s196
          %s198 = sadd.s32 %s30, %s31
          %s199 = smul.u32 8, %s198
          %s201 = ssub.s32 2048, 2048
          %202 = vsyncadd %s194, %s201
          %s203 = smul.addr %s199, 2
          %s204 = smul.addr %s203, 128
          %s205 = scalar_lea.hbm %s0, %s204
          %s206 = sshll.u32 %s197, 4
          %s207 = int_to_ptr.vmem [resolvable:$true] %s206
          %212 = dma.hbm_to_vmem [thread:$0]  %s205, 2048, %s207, %s194, 256, 256, 16
        $region20: #{tpu_custom_call.1} parent=15 // pred_fallthru
          _
        // Predicated region
        $region21: #{tpu_custom_call.1} parent=15 // pred_check
          %p213 = pneg %p85
        $region22: #{tpu_custom_call.1} parent=15 // pred_check_branch
          %215 = sbr.rel (%p213) target = $region24
        $region23: #{tpu_custom_call.1} parent=15 // pred_region
          %s216 = sand.u32 %s23, 1
          %s217 = scalar_lea.sflag [#allocation6], %s216
          %s218 = sand.u32 %s75, 1
          %s219 = smul.addr %s218, 128
          %s220 = scalar_lea.vmem [#allocation5], %s219
          %s221 = sadd.s32 %s30, %s31
          %s222 = smul.u32 8, %s221
          %s224 = ssub.s32 2048, 2048
          %225 = vsyncadd %s217, %s224
          %s226 = smul.addr %s222, 2
          %s227 = smul.addr %s226, 128
          %s228 = scalar_lea.hbm %s1, %s227
          %s229 = sshll.u32 %s220, 4
          %s230 = int_to_ptr.vmem [resolvable:$true] %s229
          %235 = dma.hbm_to_vmem [thread:$0]  %s228, 2048, %s230, %s217, 256, 256, 16
        $region24: #{tpu_custom_call.1} parent=15 // pred_fallthru
          _
        // Predicated region
        $region25: #{tpu_custom_call.1} parent=15 // pred_check
          %p236 = pneg %p113
        $region26: #{tpu_custom_call.1} parent=15 // pred_check_branch
          %238 = sbr.rel (%p236) target = $region28
        $region27: #{tpu_custom_call.1} parent=15 // pred_region
          %s239 = sand.u32 %s23, 1
          %s240 = scalar_lea.sflag [#allocation6], %s239
          %s241 = sand.u32 %s103, 1
          %s242 = smul.addr %s241, 32
          %s243 = scalar_lea.vmem [#allocation7], %s242
          %s244 = sadd.s32 %s30, %s31
          %s245 = smul.u32 2, %s244
          %s247 = ssub.s32 512, 512
          %248 = vsyncadd %s240, %s247
          %s249 = smul.addr %s245, 2
          %s250 = smul.addr %s249, 128
          %s251 = scalar_lea.hbm %s2, %s250
          %s252 = sshll.u32 %s243, 4
          %s253 = int_to_ptr.vmem [resolvable:$true] %s252
          %258 = dma.hbm_to_vmem [thread:$0]  %s251, 512, %s253, %s240, 256, 256, 16
        $region28: #{tpu_custom_call.1} parent=15 // pred_fallthru
          _
      $region16: #{tpu_custom_call.1} parent=5 // pred_fallthru
        _
      %p259 = scmp.le.s32.totalorder 1, %s23
      %p260 = scmp.lt.s32.totalorder %s23, 3
      %p261 = pnand %p259, %p260
      %p262 = pneg %p261
      // Predicated region
      $region29: #{tpu_custom_call.1} parent=5 // pred_check
        _
      $region30: #{tpu_custom_call.1} parent=5 // pred_check_branch
        %264 = sbr.rel (%p261) target = $region32
      $region31: #{tpu_custom_call.1} parent=5 // pred_region
        %s265 = ssub.s32 %s23, 1
        %s266 = sand.u32 %s50, 1
        %s267 = scalar_lea.sflag [#allocation3], %s266
        %s268 = sand.u32 %s50, 1
        %s269 = smul.addr %s268, 128
        %s270 = scalar_lea.vmem [#allocation2], %s269
        // Predicated region
        $region33: #{tpu_custom_call.1} parent=31 // pred_check
          %p271 = pneg %p63
        $region34: #{tpu_custom_call.1} parent=31 // pred_check_branch
          %273 = sbr.rel (%p271) target = $region36
        $region35: #{tpu_custom_call.1} parent=31 // pred_region
          %274 = dma.done %s267, 2048
        $region36: #{tpu_custom_call.1} parent=31 // pred_fallthru
          _
        %s275 = sand.u32 %s28, 1
        %s276 = scalar_lea.sflag [#allocation6], %s275
        %s277 = sand.u32 %s78, 1
        %s278 = smul.addr %s277, 128
        %s279 = scalar_lea.vmem [#allocation5], %s278
        // Predicated region
        $region37: #{tpu_custom_call.1} parent=31 // pred_check
          %p280 = pneg %p91
        $region38: #{tpu_custom_call.1} parent=31 // pred_check_branch
          %282 = sbr.rel (%p280) target = $region40
        $region39: #{tpu_custom_call.1} parent=31 // pred_region
          %283 = dma.done %s276, 2048
        $region40: #{tpu_custom_call.1} parent=31 // pred_fallthru
          _
        %s284 = sand.u32 %s28, 1
        %s285 = scalar_lea.sflag [#allocation6], %s284
        %s286 = sand.u32 %s106, 1
        %s287 = smul.addr %s286, 32
        %s288 = scalar_lea.vmem [#allocation7], %s287
        // Predicated region
        $region41: #{tpu_custom_call.1} parent=31 // pred_check
          %p289 = pneg %p119
        $region42: #{tpu_custom_call.1} parent=31 // pred_check_branch
          %291 = sbr.rel (%p289) target = $region44
        $region43: #{tpu_custom_call.1} parent=31 // pred_region
          %292 = dma.done %s285, 512
        $region44: #{tpu_custom_call.1} parent=31 // pred_fallthru
          _
        %s293 = sand.u32 %s50, 1
        %s294 = scalar_lea.sflag [#allocation3], %s293
        %s295 = sand.u32 %s50, 1
        %s296 = smul.addr %s295, 128
        %s297 = scalar_lea.vmem [#allocation2], %s296
        %p298 = pneg %p63
        %p299 = pneg %p60
        %s300 = sand.u32 %s28, 1
        %s301 = scalar_lea.sflag [#allocation6], %s300
        %s302 = sand.u32 %s78, 1
        %s303 = smul.addr %s302, 128
        %s304 = scalar_lea.vmem [#allocation5], %s303
        %p305 = pneg %p91
        %p306 = pneg %p88
        %s307 = sand.u32 %s28, 1
        %s308 = scalar_lea.sflag [#allocation6], %s307
        %s309 = sand.u32 %s106, 1
        %s310 = smul.addr %s309, 32
        %s311 = scalar_lea.vmem [#allocation7], %s310
        %p312 = pneg %p119
        %p313 = pneg %p116
        %p314 = pneg %p145
        %p315 = pneg %p142
        %s316 = sand.u32 %s132, 1
        %s317 = scalar_lea.sflag [#allocation4], %s316
        %s318 = sand.u32 %s132, 1
        %s319 = smul.addr %s318, 16
        %s320 = scalar_lea.vmem [#allocation8], %s319
        %p321 = pneg %p171
        %p322 = pneg %p168
        %s323 = sand.u32 %s158, 1
        %s324 = scalar_lea.sflag [#allocation10], %s323
        %s325 = sand.u32 %s158, 1
        %s326 = smul.addr %s325, 16
        %s327 = scalar_lea.vmem [#allocation9], %s326
        %s328 = sadd.s32 %s32, %s33
        %s329 = smul.u32 8, %s328
        %s330 = sadd.s32 %s32, %s33
        %s331 = smul.u32 8, %s330
        %s332 = sadd.s32 %s32, %s33
        %s333 = smul.u32 2, %s332
        %p334 = scmp.eq.s32.totalorder %s33, 0
        // Predicated region
        $region45: #{tpu_custom_call.1} parent=31 // pred_check
          %p335 = pneg %p334
        $region46: #{tpu_custom_call.1} parent=31 // pred_check_branch
          %337 = sbr.rel (%p335) target = $region48
        $region47: #{tpu_custom_call.1} parent=31 // pred_region
          %338 = vst [vmem:[%s320] sm:$0xff] 0.0
          %339 = vst [vmem:[%s320 + $0x8] sm:$0xff] 0.0
          %340 = vst [vmem:[%s327] sm:$0xff] 0.0
          %341 = vst [vmem:[%s327 + $0x8] sm:$0xff] 0.0
        $region48: #{tpu_custom_call.1} parent=31 // pred_fallthru
          _
        %v342 = vld [vmem:[%s270] sm:$0xff]
        %v343 = vld [vmem:[%s270 + $0x8] sm:$0xff]
        %v344 = vld [vmem:[%s270 + $0x10] sm:$0xff]
        %v345 = vld [vmem:[%s270 + $0x18] sm:$0xff]
        %v346 = vld [vmem:[%s270 + $0x20] sm:$0xff]
        %v347 = vld [vmem:[%s270 + $0x28] sm:$0xff]
        %v348 = vld [vmem:[%s270 + $0x30] sm:$0xff]
        %v349 = vld [vmem:[%s270 + $0x38] sm:$0xff]
        %v350 = vld [vmem:[%s270 + $0x40] sm:$0xff]
        %v351 = vld [vmem:[%s270 + $0x48] sm:$0xff]
        %v352 = vld [vmem:[%s270 + $0x50] sm:$0xff]
        %v353 = vld [vmem:[%s270 + $0x58] sm:$0xff]
        %v354 = vld [vmem:[%s270 + $0x60] sm:$0xff]
        %v355 = vld [vmem:[%s270 + $0x68] sm:$0xff]
        %v356 = vld [vmem:[%s270 + $0x70] sm:$0xff]
        %v357 = vld [vmem:[%s270 + $0x78] sm:$0xff]
        %v358 = vmul.f32 %v342, 0.5
        %v359 = vmul.f32 %v343, 0.5
        %v360 = vmul.f32 %v344, 0.5
        %v361 = vmul.f32 %v345, 0.5
        %v362 = vmul.f32 %v346, 0.5
        %v363 = vmul.f32 %v347, 0.5
        %v364 = vmul.f32 %v348, 0.5
        %v365 = vmul.f32 %v349, 0.5
        %v366 = vmul.f32 %v350, 0.5
        %v367 = vmul.f32 %v351, 0.5
        %v368 = vmul.f32 %v352, 0.5
        %v369 = vmul.f32 %v353, 0.5
        %v370 = vmul.f32 %v354, 0.5
        %v371 = vmul.f32 %v355, 0.5
        %v372 = vmul.f32 %v356, 0.5
        %v373 = vmul.f32 %v357, 0.5
        %v374 = vld [vmem:[%s279] sm:$0xff]
        %v375 = vld [vmem:[%s279 + $0x8] sm:$0xff]
        %v376 = vld [vmem:[%s279 + $0x10] sm:$0xff]
        %v377 = vld [vmem:[%s279 + $0x18] sm:$0xff]
        %v378 = vld [vmem:[%s279 + $0x20] sm:$0xff]
        %v379 = vld [vmem:[%s279 + $0x28] sm:$0xff]
        %v380 = vld [vmem:[%s279 + $0x30] sm:$0xff]
        %v381 = vld [vmem:[%s279 + $0x38] sm:$0xff]
        %v382 = vld [vmem:[%s279 + $0x40] sm:$0xff]
        %v383 = vld [vmem:[%s279 + $0x48] sm:$0xff]
        %v384 = vld [vmem:[%s279 + $0x50] sm:$0xff]
        %v385 = vld [vmem:[%s279 + $0x58] sm:$0xff]
        %v386 = vld [vmem:[%s279 + $0x60] sm:$0xff]
        %v387 = vld [vmem:[%s279 + $0x68] sm:$0xff]
        %v388 = vld [vmem:[%s279 + $0x70] sm:$0xff]
        %v389 = vld [vmem:[%s279 + $0x78] sm:$0xff]
        %v390 = vmul.f32 %v374, 0.5
        %v391 = vmul.f32 %v375, 0.5
        %v392 = vmul.f32 %v376, 0.5
        %v393 = vmul.f32 %v377, 0.5
        %v394 = vmul.f32 %v378, 0.5
        %v395 = vmul.f32 %v379, 0.5
        %v396 = vmul.f32 %v380, 0.5
        %v397 = vmul.f32 %v381, 0.5
        %v398 = vmul.f32 %v382, 0.5
        %v399 = vmul.f32 %v383, 0.5
        %v400 = vmul.f32 %v384, 0.5
        %v401 = vmul.f32 %v385, 0.5
        %v402 = vmul.f32 %v386, 0.5
        %v403 = vmul.f32 %v387, 0.5
        %v404 = vmul.f32 %v388, 0.5
        %v405 = vmul.f32 %v389, 0.5
        %v406 = vxor.u32 %v358, 2147483648
        %v407 = vxor.u32 %v359, 2147483648
        %v408 = vxor.u32 %v360, 2147483648
        %v409 = vxor.u32 %v361, 2147483648
        %v410 = vxor.u32 %v362, 2147483648
        %v411 = vxor.u32 %v363, 2147483648
        %v412 = vxor.u32 %v364, 2147483648
        %v413 = vxor.u32 %v365, 2147483648
        %v414 = vxor.u32 %v366, 2147483648
        %v415 = vxor.u32 %v367, 2147483648
        %v416 = vxor.u32 %v368, 2147483648
        %v417 = vxor.u32 %v369, 2147483648
        %v418 = vxor.u32 %v370, 2147483648
        %v419 = vxor.u32 %v371, 2147483648
        %v420 = vxor.u32 %v372, 2147483648
        %v421 = vxor.u32 %v373, 2147483648
        %v422 = vmul.f32 %v406, 1.442695
        %v423 = vpow.pop %v422
        %v424 = vmul.f32 %v407, 1.442695
        %v425 = vpow.pop %v424
        %v426 = vmul.f32 %v408, 1.442695
        %v427 = vpow.pop %v426
        %v428 = vmul.f32 %v409, 1.442695
        %v429 = vpow.pop %v428
        %v430 = vmul.f32 %v410, 1.442695
        %v431 = vpow.pop %v430
        %v432 = vmul.f32 %v411, 1.442695
        %v433 = vpow.pop %v432
        %v434 = vmul.f32 %v412, 1.442695
        %v435 = vpow.pop %v434
        %v436 = vmul.f32 %v413, 1.442695
        %v437 = vpow.pop %v436
        %v438 = vmul.f32 %v414, 1.442695
        %v439 = vpow.pop %v438
        %v440 = vmul.f32 %v415, 1.442695
        %v441 = vpow.pop %v440
        %v442 = vmul.f32 %v416, 1.442695
        %v443 = vpow.pop %v442
        %v444 = vmul.f32 %v417, 1.442695
        %v445 = vpow.pop %v444
        %v446 = vmul.f32 %v418, 1.442695
        %v447 = vpow.pop %v446
        %v448 = vmul.f32 %v419, 1.442695
        %v449 = vpow.pop %v448
        %v450 = vmul.f32 %v420, 1.442695
        %v451 = vpow.pop %v450
        %v452 = vmul.f32 %v421, 1.442695
        %v453 = vpow.pop %v452
        %v454 = vadd.f32 %v423, 1.0
        %v455 = vadd.f32 %v425, 1.0
        %v456 = vadd.f32 %v427, 1.0
        %v457 = vadd.f32 %v429, 1.0
        %v458 = vadd.f32 %v431, 1.0
        %v459 = vadd.f32 %v433, 1.0
        %v460 = vadd.f32 %v435, 1.0
        %v461 = vadd.f32 %v437, 1.0
        %v462 = vadd.f32 %v439, 1.0
        %v463 = vadd.f32 %v441, 1.0
        %v464 = vadd.f32 %v443, 1.0
        %v465 = vadd.f32 %v445, 1.0
        %v466 = vadd.f32 %v447, 1.0
        %v467 = vadd.f32 %v449, 1.0
        %v468 = vadd.f32 %v451, 1.0
        %v469 = vadd.f32 %v453, 1.0
        %v470 = vrcp.pop %v454
        %v471 = vmul.f32 1.0, %v470
        %v472 = vrcp.pop %v455
        %v473 = vmul.f32 1.0, %v472
        %v474 = vrcp.pop %v456
        %v475 = vmul.f32 1.0, %v474
        %v476 = vrcp.pop %v457
        %v477 = vmul.f32 1.0, %v476
        %v478 = vrcp.pop %v458
        %v479 = vmul.f32 1.0, %v478
        %v480 = vrcp.pop %v459
        %v481 = vmul.f32 1.0, %v480
        %v482 = vrcp.pop %v460
        %v483 = vmul.f32 1.0, %v482
        %v484 = vrcp.pop %v461
        %v485 = vmul.f32 1.0, %v484
        %v486 = vrcp.pop %v462
        %v487 = vmul.f32 1.0, %v486
        %v488 = vrcp.pop %v463
        %v489 = vmul.f32 1.0, %v488
        %v490 = vrcp.pop %v464
        %v491 = vmul.f32 1.0, %v490
        %v492 = vrcp.pop %v465
        %v493 = vmul.f32 1.0, %v492
        %v494 = vrcp.pop %v466
        %v495 = vmul.f32 1.0, %v494
        %v496 = vrcp.pop %v467
        %v497 = vmul.f32 1.0, %v496
        %v498 = vrcp.pop %v468
        %v499 = vmul.f32 1.0, %v498
        %v500 = vrcp.pop %v469
        %v501 = vmul.f32 1.0, %v500
        %v502 = vxor.u32 %v390, 2147483648
        %v503 = vxor.u32 %v391, 2147483648
        %v504 = vxor.u32 %v392, 2147483648
        %v505 = vxor.u32 %v393, 2147483648
        %v506 = vxor.u32 %v394, 2147483648
        %v507 = vxor.u32 %v395, 2147483648
        %v508 = vxor.u32 %v396, 2147483648
        %v509 = vxor.u32 %v397, 2147483648
        %v510 = vxor.u32 %v398, 2147483648
        %v511 = vxor.u32 %v399, 2147483648
        %v512 = vxor.u32 %v400, 2147483648
        %v513 = vxor.u32 %v401, 2147483648
        %v514 = vxor.u32 %v402, 2147483648
        %v515 = vxor.u32 %v403, 2147483648
        %v516 = vxor.u32 %v404, 2147483648
        %v517 = vxor.u32 %v405, 2147483648
        %v518 = vmul.f32 %v502, 1.442695
        %v519 = vpow.pop %v518
        %v520 = vmul.f32 %v503, 1.442695
        %v521 = vpow.pop %v520
        %v522 = vmul.f32 %v504, 1.442695
        %v523 = vpow.pop %v522
        %v524 = vmul.f32 %v505, 1.442695
        %v525 = vpow.pop %v524
        %v526 = vmul.f32 %v506, 1.442695
        %v527 = vpow.pop %v526
        %v528 = vmul.f32 %v507, 1.442695
        %v529 = vpow.pop %v528
        %v530 = vmul.f32 %v508, 1.442695
        %v531 = vpow.pop %v530
        %v532 = vmul.f32 %v509, 1.442695
        %v533 = vpow.pop %v532
        %v534 = vmul.f32 %v510, 1.442695
        %v535 = vpow.pop %v534
        %v536 = vmul.f32 %v511, 1.442695
        %v537 = vpow.pop %v536
        %v538 = vmul.f32 %v512, 1.442695
        %v539 = vpow.pop %v538
        %v540 = vmul.f32 %v513, 1.442695
        %v541 = vpow.pop %v540
        %v542 = vmul.f32 %v514, 1.442695
        %v543 = vpow.pop %v542
        %v544 = vmul.f32 %v515, 1.442695
        %v545 = vpow.pop %v544
        %v546 = vmul.f32 %v516, 1.442695
        %v547 = vpow.pop %v546
        %v548 = vmul.f32 %v517, 1.442695
        %v549 = vpow.pop %v548
        %v550 = vadd.f32 %v519, 1.0
        %v551 = vadd.f32 %v521, 1.0
        %v552 = vadd.f32 %v523, 1.0
        %v553 = vadd.f32 %v525, 1.0
        %v554 = vadd.f32 %v527, 1.0
        %v555 = vadd.f32 %v529, 1.0
        %v556 = vadd.f32 %v531, 1.0
        %v557 = vadd.f32 %v533, 1.0
        %v558 = vadd.f32 %v535, 1.0
        %v559 = vadd.f32 %v537, 1.0
        %v560 = vadd.f32 %v539, 1.0
        %v561 = vadd.f32 %v541, 1.0
        %v562 = vadd.f32 %v543, 1.0
        %v563 = vadd.f32 %v545, 1.0
        %v564 = vadd.f32 %v547, 1.0
        %v565 = vadd.f32 %v549, 1.0
        %v566 = vrcp.pop %v550
        %v567 = vmul.f32 1.0, %v566
        %v568 = vrcp.pop %v551
        %v569 = vmul.f32 1.0, %v568
        %v570 = vrcp.pop %v552
        %v571 = vmul.f32 1.0, %v570
        %v572 = vrcp.pop %v553
        %v573 = vmul.f32 1.0, %v572
        %v574 = vrcp.pop %v554
        %v575 = vmul.f32 1.0, %v574
        %v576 = vrcp.pop %v555
        %v577 = vmul.f32 1.0, %v576
        %v578 = vrcp.pop %v556
        %v579 = vmul.f32 1.0, %v578
        %v580 = vrcp.pop %v557
        %v581 = vmul.f32 1.0, %v580
        %v582 = vrcp.pop %v558
        %v583 = vmul.f32 1.0, %v582
        %v584 = vrcp.pop %v559
        %v585 = vmul.f32 1.0, %v584
        %v586 = vrcp.pop %v560
        %v587 = vmul.f32 1.0, %v586
        %v588 = vrcp.pop %v561
        %v589 = vmul.f32 1.0, %v588
        %v590 = vrcp.pop %v562
        %v591 = vmul.f32 1.0, %v590
        %v592 = vrcp.pop %v563
        %v593 = vmul.f32 1.0, %v592
        %v594 = vrcp.pop %v564
        %v595 = vmul.f32 1.0, %v594
        %v596 = vrcp.pop %v565
        %v597 = vmul.f32 1.0, %v596
        %v598 = vsub.f32 %v390, %v358
        %v599 = vsub.f32 %v391, %v359
        %v600 = vsub.f32 %v392, %v360
        %v601 = vsub.f32 %v393, %v361
        %v602 = vsub.f32 %v394, %v362
        %v603 = vsub.f32 %v395, %v363
        %v604 = vsub.f32 %v396, %v364
        %v605 = vsub.f32 %v397, %v365
        %v606 = vsub.f32 %v398, %v366
        %v607 = vsub.f32 %v399, %v367
        %v608 = vsub.f32 %v400, %v368
        %v609 = vsub.f32 %v401, %v369
        %v610 = vsub.f32 %v402, %v370
        %v611 = vsub.f32 %v403, %v371
        %v612 = vsub.f32 %v404, %v372
        %v613 = vsub.f32 %v405, %v373
        %v614 = vmul.f32 %v567, %v598
        %v615 = vmul.f32 %v569, %v599
        %v616 = vmul.f32 %v571, %v600
        %v617 = vmul.f32 %v573, %v601
        %v618 = vmul.f32 %v575, %v602
        %v619 = vmul.f32 %v577, %v603
        %v620 = vmul.f32 %v579, %v604
        %v621 = vmul.f32 %v581, %v605
        %v622 = vmul.f32 %v583, %v606
        %v623 = vmul.f32 %v585, %v607
        %v624 = vmul.f32 %v587, %v608
        %v625 = vmul.f32 %v589, %v609
        %v626 = vmul.f32 %v591, %v610
        %v627 = vmul.f32 %v593, %v611
        %v628 = vmul.f32 %v595, %v612
        %v629 = vmul.f32 %v597, %v613
        %v630 = vsub.f32 1.0, %v567
        %v631 = vsub.f32 1.0, %v569
        %v632 = vsub.f32 1.0, %v571
        %v633 = vsub.f32 1.0, %v573
        %v634 = vsub.f32 1.0, %v575
        %v635 = vsub.f32 1.0, %v577
        %v636 = vsub.f32 1.0, %v579
        %v637 = vsub.f32 1.0, %v581
        %v638 = vsub.f32 1.0, %v583
        %v639 = vsub.f32 1.0, %v585
        %v640 = vsub.f32 1.0, %v587
        %v641 = vsub.f32 1.0, %v589
        %v642 = vsub.f32 1.0, %v591
        %v643 = vsub.f32 1.0, %v593
        %v644 = vsub.f32 1.0, %v595
        %v645 = vsub.f32 1.0, %v597
        %v646 = vadd.f32 %v630, 1e-09
        %v647 = vadd.f32 %v631, 1e-09
        %v648 = vadd.f32 %v632, 1e-09
        %v649 = vadd.f32 %v633, 1e-09
        %v650 = vadd.f32 %v634, 1e-09
        %v651 = vadd.f32 %v635, 1e-09
        %v652 = vadd.f32 %v636, 1e-09
        %v653 = vadd.f32 %v637, 1e-09
        %v654 = vadd.f32 %v638, 1e-09
        %v655 = vadd.f32 %v639, 1e-09
        %v656 = vadd.f32 %v640, 1e-09
        %v657 = vadd.f32 %v641, 1e-09
        %v658 = vadd.f32 %v642, 1e-09
        %v659 = vadd.f32 %v643, 1e-09
        %v660 = vadd.f32 %v644, 1e-09
        %v661 = vadd.f32 %v645, 1e-09
        %v662 = vlog2.pop %v646
        %v663 = vmul.f32 %v662, 0.6931472
        %v664 = vlog2.pop %v647
        %v665 = vmul.f32 %v664, 0.6931472
        %v666 = vlog2.pop %v648
        %v667 = vmul.f32 %v666, 0.6931472
        %v668 = vlog2.pop %v649
        %v669 = vmul.f32 %v668, 0.6931472
        %v670 = vlog2.pop %v650
        %v671 = vmul.f32 %v670, 0.6931472
        %v672 = vlog2.pop %v651
        %v673 = vmul.f32 %v672, 0.6931472
        %v674 = vlog2.pop %v652
        %v675 = vmul.f32 %v674, 0.6931472
        %v676 = vlog2.pop %v653
        %v677 = vmul.f32 %v676, 0.6931472
        %v678 = vlog2.pop %v654
        %v679 = vmul.f32 %v678, 0.6931472
        %v680 = vlog2.pop %v655
        %v681 = vmul.f32 %v680, 0.6931472
        %v682 = vlog2.pop %v656
        %v683 = vmul.f32 %v682, 0.6931472
        %v684 = vlog2.pop %v657
        %v685 = vmul.f32 %v684, 0.6931472
        %v686 = vlog2.pop %v658
        %v687 = vmul.f32 %v686, 0.6931472
        %v688 = vlog2.pop %v659
        %v689 = vmul.f32 %v688, 0.6931472
        %v690 = vlog2.pop %v660
        %v691 = vmul.f32 %v690, 0.6931472
        %v692 = vlog2.pop %v661
        %v693 = vmul.f32 %v692, 0.6931472
        %v694 = vsub.f32 1.0, %v471
        %v695 = vsub.f32 1.0, %v473
        %v696 = vsub.f32 1.0, %v475
        %v697 = vsub.f32 1.0, %v477
        %v698 = vsub.f32 1.0, %v479
        %v699 = vsub.f32 1.0, %v481
        %v700 = vsub.f32 1.0, %v483
        %v701 = vsub.f32 1.0, %v485
        %v702 = vsub.f32 1.0, %v487
        %v703 = vsub.f32 1.0, %v489
        %v704 = vsub.f32 1.0, %v491
        %v705 = vsub.f32 1.0, %v493
        %v706 = vsub.f32 1.0, %v495
        %v707 = vsub.f32 1.0, %v497
        %v708 = vsub.f32 1.0, %v499
        %v709 = vsub.f32 1.0, %v501
        %v710 = vadd.f32 %v694, 1e-09
        %v711 = vadd.f32 %v695, 1e-09
        %v712 = vadd.f32 %v696, 1e-09
        %v713 = vadd.f32 %v697, 1e-09
        %v714 = vadd.f32 %v698, 1e-09
        %v715 = vadd.f32 %v699, 1e-09
        %v716 = vadd.f32 %v700, 1e-09
        %v717 = vadd.f32 %v701, 1e-09
        %v718 = vadd.f32 %v702, 1e-09
        %v719 = vadd.f32 %v703, 1e-09
        %v720 = vadd.f32 %v704, 1e-09
        %v721 = vadd.f32 %v705, 1e-09
        %v722 = vadd.f32 %v706, 1e-09
        %v723 = vadd.f32 %v707, 1e-09
        %v724 = vadd.f32 %v708, 1e-09
        %v725 = vadd.f32 %v709, 1e-09
        %v726 = vlog2.pop %v710
        %v727 = vmul.f32 %v726, 0.6931472
        %v728 = vlog2.pop %v711
        %v729 = vmul.f32 %v728, 0.6931472
        %v730 = vlog2.pop %v712
        %v731 = vmul.f32 %v730, 0.6931472
        %v732 = vlog2.pop %v713
        %v733 = vmul.f32 %v732, 0.6931472
        %v734 = vlog2.pop %v714
        %v735 = vmul.f32 %v734, 0.6931472
        %v736 = vlog2.pop %v715
        %v737 = vmul.f32 %v736, 0.6931472
        %v738 = vlog2.pop %v716
        %v739 = vmul.f32 %v738, 0.6931472
        %v740 = vlog2.pop %v717
        %v741 = vmul.f32 %v740, 0.6931472
        %v742 = vlog2.pop %v718
        %v743 = vmul.f32 %v742, 0.6931472
        %v744 = vlog2.pop %v719
        %v745 = vmul.f32 %v744, 0.6931472
        %v746 = vlog2.pop %v720
        %v747 = vmul.f32 %v746, 0.6931472
        %v748 = vlog2.pop %v721
        %v749 = vmul.f32 %v748, 0.6931472
        %v750 = vlog2.pop %v722
        %v751 = vmul.f32 %v750, 0.6931472
        %v752 = vlog2.pop %v723
        %v753 = vmul.f32 %v752, 0.6931472
        %v754 = vlog2.pop %v724
        %v755 = vmul.f32 %v754, 0.6931472
        %v756 = vlog2.pop %v725
        %v757 = vmul.f32 %v756, 0.6931472
        %v758 = vsub.f32 %v663, %v727
        %v759 = vsub.f32 %v665, %v729
        %v760 = vsub.f32 %v667, %v731
        %v761 = vsub.f32 %v669, %v733
        %v762 = vsub.f32 %v671, %v735
        %v763 = vsub.f32 %v673, %v737
        %v764 = vsub.f32 %v675, %v739
        %v765 = vsub.f32 %v677, %v741
        %v766 = vsub.f32 %v679, %v743
        %v767 = vsub.f32 %v681, %v745
        %v768 = vsub.f32 %v683, %v747
        %v769 = vsub.f32 %v685, %v749
        %v770 = vsub.f32 %v687, %v751
        %v771 = vsub.f32 %v689, %v753
        %v772 = vsub.f32 %v691, %v755
        %v773 = vsub.f32 %v693, %v757
        %v774 = vadd.f32 %v614, %v758
        %v775 = vadd.f32 %v615, %v759
        %v776 = vadd.f32 %v616, %v760
        %v777 = vadd.f32 %v617, %v761
        %v778 = vadd.f32 %v618, %v762
        %v779 = vadd.f32 %v619, %v763
        %v780 = vadd.f32 %v620, %v764
        %v781 = vadd.f32 %v621, %v765
        %v782 = vadd.f32 %v622, %v766
        %v783 = vadd.f32 %v623, %v767
        %v784 = vadd.f32 %v624, %v768
        %v785 = vadd.f32 %v625, %v769
        %v786 = vadd.f32 %v626, %v770
        %v787 = vadd.f32 %v627, %v771
        %v788 = vadd.f32 %v628, %v772
        %v789 = vadd.f32 %v629, %v773
        %v790 = vld [vmem:[%s288] sm:$0xff]
        %v791 = vld [vmem:[%s288 + $0x8] sm:$0xff]
        %v792 = vld [vmem:[%s288 + $0x10] sm:$0xff]
        %v793 = vld [vmem:[%s288 + $0x18] sm:$0xff]
        %v794 = vunpack.c.0.s8 %v790
        %v795 = vunpack.c.0.s8 %v791
        %v796 = vunpack.c.1.s8 %v790
        %v797 = vunpack.c.1.s8 %v791
        %v798 = vunpack.c.2.s8 %v790
        %v799 = vunpack.c.2.s8 %v791
        %v800 = vunpack.c.3.s8 %v790
        %v801 = vunpack.c.3.s8 %v791
        %v802 = vunpack.c.0.s8 %v792
        %v803 = vunpack.c.0.s8 %v793
        %v804 = vunpack.c.1.s8 %v792
        %v805 = vunpack.c.1.s8 %v793
        %v806 = vunpack.c.2.s8 %v792
        %v807 = vunpack.c.2.s8 %v793
        %v808 = vunpack.c.3.s8 %v792
        %v809 = vunpack.c.3.s8 %v793
        %v810 = vcvt.s32.f32 %v794
        %v811 = vcvt.s32.f32 %v795
        %v812 = vcvt.s32.f32 %v796
        %v813 = vcvt.s32.f32 %v797
        %v814 = vcvt.s32.f32 %v798
        %v815 = vcvt.s32.f32 %v799
        %v816 = vcvt.s32.f32 %v800
        %v817 = vcvt.s32.f32 %v801
        %v818 = vcvt.s32.f32 %v802
        %v819 = vcvt.s32.f32 %v803
        %v820 = vcvt.s32.f32 %v804
        %v821 = vcvt.s32.f32 %v805
        %v822 = vcvt.s32.f32 %v806
        %v823 = vcvt.s32.f32 %v807
        %v824 = vcvt.s32.f32 %v808
        %v825 = vcvt.s32.f32 %v809
        %v826 = vld [vmem:[%s320] sm:$0xff]
        %v827 = vld [vmem:[%s320 + $0x8] sm:$0xff]
        %v828 = vmul.f32 %v774, %v810
        %v829 = vmul.f32 %v775, %v811
        %v830 = vmul.f32 %v776, %v812
        %v831 = vmul.f32 %v777, %v813
        %v832 = vmul.f32 %v778, %v814
        %v833 = vmul.f32 %v779, %v815
        %v834 = vmul.f32 %v780, %v816
        %v835 = vmul.f32 %v781, %v817
        %v836 = vmul.f32 %v782, %v818
        %v837 = vmul.f32 %v783, %v819
        %v838 = vmul.f32 %v784, %v820
        %v839 = vmul.f32 %v785, %v821
        %v840 = vmul.f32 %v786, %v822
        %v841 = vmul.f32 %v787, %v823
        %v842 = vmul.f32 %v788, %v824
        %v843 = vmul.f32 %v789, %v825
        %v844 = vadd.f32 %v828, %v830
        %v845 = vadd.f32 %v844, %v832
        %v846 = vadd.f32 %v845, %v834
        %v847 = vadd.f32 %v846, %v836
        %v848 = vadd.f32 %v847, %v838
        %v849 = vadd.f32 %v848, %v840
        %v850 = vadd.f32 %v849, %v842
        %v851 = vadd.f32 %v829, %v831
        %v852 = vadd.f32 %v851, %v833
        %v853 = vadd.f32 %v852, %v835
        %v854 = vadd.f32 %v853, %v837
        %v855 = vadd.f32 %v854, %v839
        %v856 = vadd.f32 %v855, %v841
        %v857 = vadd.f32 %v856, %v843
        %v858 = vadd.f32 %v826, %v850
        %v859 = vadd.f32 %v827, %v857
        %860 = vst [vmem:[%s320] sm:$0xff] %v858
        %861 = vst [vmem:[%s320 + $0x8] sm:$0xff] %v859
        %v862 = vld [vmem:[%s327] sm:$0xff]
        %v863 = vld [vmem:[%s327 + $0x8] sm:$0xff]
        %v864 = vadd.f32 %v810, %v812
        %v865 = vadd.f32 %v864, %v814
        %v866 = vadd.f32 %v865, %v816
        %v867 = vadd.f32 %v866, %v818
        %v868 = vadd.f32 %v867, %v820
        %v869 = vadd.f32 %v868, %v822
        %v870 = vadd.f32 %v869, %v824
        %v871 = vadd.f32 %v811, %v813
        %v872 = vadd.f32 %v871, %v815
        %v873 = vadd.f32 %v872, %v817
        %v874 = vadd.f32 %v873, %v819
        %v875 = vadd.f32 %v874, %v821
        %v876 = vadd.f32 %v875, %v823
        %v877 = vadd.f32 %v876, %v825
        %v878 = vadd.f32 %v862, %v870
        %v879 = vadd.f32 %v863, %v877
        %880 = vst [vmem:[%s327] sm:$0xff] %v878
        %881 = vst [vmem:[%s327 + $0x8] sm:$0xff] %v879
        %s882 = sand.u32 %s132, 1
        %s883 = scalar_lea.sflag [#allocation4], %s882
        %s884 = sand.u32 %s132, 1
        %s885 = smul.addr %s884, 16
        %s886 = scalar_lea.vmem [#allocation8], %s885
        %s887 = sand.u32 %s158, 1
        %s888 = scalar_lea.sflag [#allocation10], %s887
        %s889 = sand.u32 %s158, 1
        %s890 = smul.addr %s889, 16
        %s891 = scalar_lea.vmem [#allocation9], %s890
        // Predicated region
        $region49: #{tpu_custom_call.1} parent=31 // pred_check
          %p892 = pneg %p142
        $region50: #{tpu_custom_call.1} parent=31 // pred_check_branch
          %894 = sbr.rel (%p892) target = $region52
        $region51: #{tpu_custom_call.1} parent=31 // pred_region
          %s896 = ssub.s32 256, 256
          %897 = vsyncadd %s883, %s896
          %s898 = smul.addr %s32, 2
          %s899 = smul.addr %s898, 128
          %s900 = scalar_lea.hbm %s3, %s899
          %s902 = sshll.u32 %s886, 4
          %s903 = int_to_ptr.vmem [resolvable:$true] %s902
          %905 = dma.vmem_to_hbm [thread:$0]  %s903, 256, %s900, %s883
        $region52: #{tpu_custom_call.1} parent=31 // pred_fallthru
          _
        // Predicated region
        $region53: #{tpu_custom_call.1} parent=31 // pred_check
          %p906 = pneg %p168
        $region54: #{tpu_custom_call.1} parent=31 // pred_check_branch
          %908 = sbr.rel (%p906) target = $region56
        $region55: #{tpu_custom_call.1} parent=31 // pred_region
          %s910 = ssub.s32 256, 256
          %911 = vsyncadd %s888, %s910
          %s912 = smul.addr %s32, 2
          %s913 = smul.addr %s912, 128
          %s914 = scalar_lea.hbm %s4, %s913
          %s916 = sshll.u32 %s891, 4
          %s917 = int_to_ptr.vmem [resolvable:$true] %s916
          %919 = dma.vmem_to_hbm [thread:$0]  %s917, 256, %s914, %s888
        $region56: #{tpu_custom_call.1} parent=31 // pred_fallthru
          _
      $region32: #{tpu_custom_call.1} parent=5 // pred_fallthru
        _
      %p920 = scmp.le.s32.totalorder 2, %s23
      // Predicated region
      $region57: #{tpu_custom_call.1} parent=5 // pred_check
        %p921 = pneg %p920
      $region58: #{tpu_custom_call.1} parent=5 // pred_check_branch
        %923 = sbr.rel (%p921) target = $region60
      $region59: #{tpu_custom_call.1} parent=5 // pred_region
        %s924 = ssub.s32 %s23, 2
        // Predicated region
        $region61: #{tpu_custom_call.1} parent=59 // pred_check
          %p925 = pneg %p148
        $region62: #{tpu_custom_call.1} parent=59 // pred_check_branch
          %927 = sbr.rel (%p925) target = $region64
        $region63: #{tpu_custom_call.1} parent=59 // pred_region
          %s928 = sand.u32 %s133, 1
          %s929 = scalar_lea.sflag [#allocation4], %s928
          %s930 = sand.u32 %s133, 1
          %s931 = smul.addr %s930, 16
          %s932 = scalar_lea.vmem [#allocation8], %s931
          %933 = dma.done %s929, 256
        $region64: #{tpu_custom_call.1} parent=59 // pred_fallthru
          _
        // Predicated region
        $region65: #{tpu_custom_call.1} parent=59 // pred_check
          %p934 = pneg %p174
        $region66: #{tpu_custom_call.1} parent=59 // pred_check_branch
          %936 = sbr.rel (%p934) target = $region68
        $region67: #{tpu_custom_call.1} parent=59 // pred_region
          %s937 = sand.u32 %s159, 1
          %s938 = scalar_lea.sflag [#allocation10], %s937
          %s939 = sand.u32 %s159, 1
          %s940 = smul.addr %s939, 16
          %s941 = scalar_lea.vmem [#allocation9], %s940
          %942 = dma.done %s938, 256
        $region68: #{tpu_custom_call.1} parent=59 // pred_fallthru
          _
      $region60: #{tpu_custom_call.1} parent=5 // pred_fallthru
        _
    $region6: #{tpu_custom_call.1} parent=1 // loop_footer
      %s27 = sadd.s32 1, %s23
    $region7: #{tpu_custom_call.1} parent=1 // loop_footer_branch
      %22 = sbr.rel target = $region3
    $region8: #{tpu_custom_call.1} parent=1 // loop_exit
      _
    %943 = vsyncpa [#allocation3], 1
    %s944 = scalar_lea.sflag [#allocation3], 1
    %945 = vsyncpa %s944, 1
    %946 = vsyncpa [#allocation6], 1
    %s947 = scalar_lea.sflag [#allocation6], 1
    %948 = vsyncpa %s947, 1
    %949 = vsyncpa [#allocation4], 1
    %s950 = scalar_lea.sflag [#allocation4], 1
    %951 = vsyncpa %s950, 1
    %952 = vsyncpa [#allocation10], 1
    %s953 = scalar_lea.sflag [#allocation10], 1
    %954 = vsyncpa %s953, 1

</llo_original>
